<compile_context>
chip_gen: v7x
topology: tpu7x:2x2x1
jax: 0.10.0
libtpu: 0.0.40
codegen_flags: <defaults>
</compile_context>

<pallas_src>
import functools

import jax
import jax.numpy as jnp
import numpy as np
from jax import lax
from jax.experimental import pallas as pl
from jax.experimental.pallas import tpu as pltpu


def _round_up(n, m):
    return ((n + m - 1) // m) * m


def _cdiv(a, b):
    return (a + b - 1) // b


def _vmem_limit_bytes():
    """Generation-aware scoped-VMEM budget (~48 MiB on v7x, ~96 MiB on v5e/v6e)."""
    cap = 128 * 1024 * 1024
    try:
        cap = int(pltpu.get_tpu_info().vmem_capacity_bytes)
    except Exception:
        pass
    return max(32 * 1024 * 1024, min((cap * 3) // 4, 100 * 1024 * 1024))


def _row_tile(n_rows, per_row_bytes, resident_bytes, vmem_limit, max_rows=512):
    """Row tile for the parallel kernels: big (<=512), VMEM-safe, multiple of 8,
    and split into >=2 tiles when that costs no extra padding (v7x 2nd core)."""
    n8 = _round_up(max(n_rows, 1), 8)
    tn = _round_up(_cdiv(n8, max(1, _cdiv(n8, max_rows))), 8)
    budget = int(vmem_limit * 0.9) - resident_bytes
    while tn > 8 and 2 * tn * per_row_bytes > budget:
        tn -= 8
    if _round_up(n_rows, tn) // tn < 2 and n8 >= 16 and n8 % 16 == 0:
        tn = min(tn, n8 // 2)
    n_pad = _round_up(n_rows, tn)
    return tn, n_pad


# ----------------------------------------------------------------------------
# Kernel A: hoisted input projection for all timesteps (parallel rows).
#   gx = relu(x) @ W_ih^T + (b_ih + [b_hh_r, b_hh_z, 0])        (bf16 output)
# ----------------------------------------------------------------------------
def _in_proj_kernel(x_ref, w_ref, b_ref, gx_ref):
    x = jnp.maximum(x_ref[...], 0.0).astype(jnp.bfloat16)        # F.relu, bf16
    gx_ref[...] = (jnp.dot(x, w_ref[...], preferred_element_type=jnp.float32)
                   + b_ref[...]).astype(gx_ref.dtype)


def _in_proj(x_2d, w_ih_t, b_in, vmem_limit):
    n, e = x_2d.shape
    g = w_ih_t.shape[-1]                                          # 3H
    x_bytes = x_2d.dtype.itemsize
    tn, n_pad = _row_tile(n, per_row_bytes=e * x_bytes + g * 2,
                          resident_bytes=e * g * 2 + g * 4,
                          vmem_limit=vmem_limit)
    if n_pad != n:
        x_2d = jnp.pad(x_2d, ((0, n_pad - n), (0, 0)))
    gx = pl.pallas_call(
        _in_proj_kernel,
        out_shape=jax.ShapeDtypeStruct((n_pad, g), jnp.bfloat16),
        grid=(n_pad // tn,),
        in_specs=[
            pl.BlockSpec((tn, e), lambda i: (i, 0)),
            pl.BlockSpec((e, g), lambda i: (0, 0)),    # resident W_ih (bf16)
            pl.BlockSpec((1, g), lambda i: (0, 0)),    # resident folded bias
        ],
        out_specs=pl.BlockSpec((tn, g), lambda i: (i, 0)),
        compiler_params=pltpu.CompilerParams(
            dimension_semantics=("parallel",),
            vmem_limit_bytes=vmem_limit),
        cost_estimate=pl.CostEstimate(
            flops=2 * n_pad * e * g, transcendentals=0,
            bytes_accessed=n_pad * e * x_bytes + e * g * 2 + n_pad * g * 2),
    )(x_2d, w_ih_t, b_in)
    return gx[:n] if n_pad != n else gx


# ----------------------------------------------------------------------------
# Kernel B: GRU recurrence.  Grid = (batch tiles "parallel", time chunks
# "arbitrary").  Hidden state persists in VMEM scratch across time chunks.
# gx / y are batch-major in HBM; each chunk is transposed to a time-major
# scratch in-kernel so per-step loads/stores are lane-dense (TB, 3H)/(TB, H).
# PyTorch gate order [r, z, n]; gate math in f32; only the n-gate b_hh is used
# here (the r/z thirds were folded into Kernel A's bias).
# ----------------------------------------------------------------------------
def _gru_kernel(gx_ref, h0_ref, whh_ref, bhhn_ref, y_ref, hN_ref,
                gxt_ref, yt_ref, h_ref, *, bulk_transpose):
    si = pl.program_id(1)
    n_chunks = pl.num_programs(1)
    ts, tb, g = gxt_ref.shape
    hd = h0_ref.shape[-1]

    @pl.when(si == 0)
    def _():
        h_ref[...] = h0_ref[...]

    # batch-major (TB, TS, 3H) bf16 chunk -> time-major f32 scratch (per chunk)
    if bulk_transpose:
        gxt_ref[...] = pltpu.einshape("bts->tbs", gx_ref[...].astype(jnp.float32))
    else:
        for t in range(ts):
            gxt_ref[t] = gx_ref[:, t, :].astype(jnp.float32)

    w_hh = whh_ref[...]                                   # (H, 3H) bf16, hoisted
    b_hh_n = jnp.broadcast_to(bhhn_ref[...], (tb, hd))    # hoisted broadcast

    def step(t, carry):
        h_prev = h_ref[...]                                        # (TB, H) f32
        gh = jnp.dot(h_prev.astype(jnp.bfloat16), w_hh,
                     preferred_element_type=jnp.float32)           # serial MXU op
        gx = gxt_ref[t]                                            # (TB, 3H) f32
        r = jax.nn.sigmoid(gx[:, 0:hd] + gh[:, 0:hd])
        z = jax.nn.sigmoid(gx[:, hd:2 * hd] + gh[:, hd:2 * hd])
        n = jnp.tanh(gx[:, 2 * hd:] + r * (gh[:, 2 * hd:] + b_hh_n))
        h_new = (1.0 - z) * n + z * h_prev
        h_ref[...] = h_new
        yt_ref[t] = h_new
        return carry

    lax.fori_loop(0, ts, step, 0)                         # no unroll (serial dep)

    # time-major f32 scratch -> batch-major bf16 output block
    if bulk_transpose:
        y_ref[...] = pltpu.einshape("tbh->bth", yt_ref[...]).astype(y_ref.dtype)
    else:
        for t in range(ts):
            y_ref[:, t, :] = yt_ref[t].astype(y_ref.dtype)

    @pl.when(si == n_chunks - 1)
    def _():
        hN_ref[...] = h_ref[...]


def _gru_vmem_bytes(tb, ts, h, g):
    return (2 * tb * ts * g * 2          # gx blocks (bf16, double-buffered)
            + 2 * tb * ts * h * 2        # y blocks (bf16, double-buffered)
            + tb * ts * g * 4            # gxt scratch (f32, time-major)
            + tb * ts * h * 4            # yt scratch (f32, time-major)
            + 6 * tb * h * 4             # h0 blocks, hN block, h state
            + 2 * h * g * 2 + 2 * g * 4)


def _gru_tiles(B, S, H, G, vmem_limit, max_ts, max_tb):
    b_pad = _round_up(B, 8)
    budget = int(vmem_limit * 0.9)
    # time-chunk length: a multiple of 8 dividing S exactly (or S itself)
    ts_opts = [c for c in range(min(max_ts, S), 0, -1)
               if S % c == 0 and (c % 8 == 0 or c == S)] or [S]
    tb = min(max_tb, b_pad)              # big batch tile -> fills the MXU
    ts = ts_opts[-1]
    for cand in ts_opts:
        if _gru_vmem_bytes(tb, cand, H, G) <= budget:
            ts = cand
            break
    while tb > 8 and _gru_vmem_bytes(tb, ts, H, G) > budget:
        tb -= 8
    # >=2 batch tiles (feeds v7x's 2nd TensorCore) when it adds no padding
    if b_pad // tb < 2 and b_pad >= 16 and b_pad % 16 == 0:
        tb = min(tb, b_pad // 2)
    b_pad = _round_up(b_pad, tb)
    return tb, ts, b_pad


def _gru_forward(gx, h0, w_hh_t, b_hh_n, tb, ts, vmem_limit):
    b_pad, s, g = gx.shape
    h = h0.shape[-1]
    grid = (b_pad // tb, s // ts)

    def run(bulk_transpose):
        kern = functools.partial(_gru_kernel, bulk_transpose=bulk_transpose)
        return pl.pallas_call(
            kern,
            out_shape=(jax.ShapeDtypeStruct((b_pad, s, h), jnp.bfloat16),
                       jax.ShapeDtypeStruct((b_pad, h), jnp.float32)),
            grid=grid,
            in_specs=[
                pl.BlockSpec((tb, ts, g), lambda bi, si: (bi, si, 0)),  # gx bf16
                pl.BlockSpec((tb, h), lambda bi, si: (bi, 0)),          # h0 f32
                pl.BlockSpec((h, g), lambda bi, si: (0, 0)),            # W_hh bf16
                pl.BlockSpec((1, h), lambda bi, si: (0, 0)),            # b_hh (n)
            ],
            out_specs=[
                pl.BlockSpec((tb, ts, h), lambda bi, si: (bi, si, 0)),  # y bf16
                pl.BlockSpec((tb, h), lambda bi, si: (bi, 0)),          # hN f32
            ],
            scratch_shapes=[
                pltpu.VMEM((ts, tb, g), jnp.float32),   # time-major gx chunk
                pltpu.VMEM((ts, tb, h), jnp.float32),   # time-major y chunk
                pltpu.VMEM((tb, h), jnp.float32),       # carried hidden state
            ],
            compiler_params=pltpu.CompilerParams(
                dimension_semantics=("parallel", "arbitrary"),
                vmem_limit_bytes=vmem_limit),
            cost_estimate=pl.CostEstimate(
                flops=2 * s * b_pad * h * g + 12 * s * b_pad * h,
                transcendentals=3 * s * b_pad * h,
                bytes_accessed=(b_pad * s * g * 2 + b_pad * h * 4 + h * g * 2
                                + h * 4 + b_pad * s * h * 2 + b_pad * h * 4)),
        )(gx, h0, w_hh_t, b_hh_n)

    try:
        return run(True)      # bulk pltpu.einshape chunk transposes (preferred)
    except Exception:
        return run(False)     # portable per-row copy fallback


# ----------------------------------------------------------------------------
# Kernel C: Linear(H -> V) + LogSoftmax, row-tiled, weight block resident.
# ----------------------------------------------------------------------------
def _out_kernel(y_ref, w_ref, b_ref, o_ref):
    logits = (jnp.dot(y_ref[...].astype(jnp.bfloat16), w_ref[...],
                      preferred_element_type=jnp.float32) + b_ref[...])
    m = jnp.max(logits, axis=-1, keepdims=True)
    shifted = logits - m
    lse = jnp.log(jnp.sum(jnp.exp(shifted), axis=-1, keepdims=True))
    o_ref[...] = (shifted - lse).astype(o_ref.dtype)


def _out_logsoftmax(y_2d, w_out_t, b_out, vmem_limit):
    n, h = y_2d.shape
    v = w_out_t.shape[-1]
    # TODO(synk): for vocab sizes where the (H, V) bf16 weight no longer fits
    # VMEM (e.g. V ~ 32k on v7x), tile V on a second grid axis with an online
    # max/log-sum-exp pass plus a cheap normalisation kernel.
    tn, n_pad = _row_tile(n, per_row_bytes=h * 2 + v * 4,
                          resident_bytes=h * v * 2 + v * 4,
                          vmem_limit=vmem_limit)
    if n_pad != n:
        y_2d = jnp.pad(y_2d, ((0, n_pad - n), (0, 0)))
    logp = pl.pallas_call(
        _out_kernel,
        out_shape=jax.ShapeDtypeStruct((n_pad, v), jnp.float32),
        grid=(n_pad // tn,),
        in_specs=[
            pl.BlockSpec((tn, h), lambda i: (i, 0)),
            pl.BlockSpec((h, v), lambda i: (0, 0)),    # resident W_out (bf16)
            pl.BlockSpec((1, v), lambda i: (0, 0)),
        ],
        out_specs=pl.BlockSpec((tn, v), lambda i: (i, 0)),
        compiler_params=pltpu.CompilerParams(
            dimension_semantics=("parallel",),
            vmem_limit_bytes=vmem_limit),
        cost_estimate=pl.CostEstimate(
            flops=2 * n_pad * h * v, transcendentals=n_pad * v,
            bytes_accessed=n_pad * h * 2 + h * v * 2 + n_pad * v * 4),
    )(y_2d, w_out_t, b_out)
    return logp[:n] if n_pad != n else logp


# ----------------------------------------------------------------------------
# Decoder: parameters + forward, mirroring the PyTorch module.
#   forward(input (B,S,E), prev_state (1,B,H)) -> (log_probs (B,S,V), (1,B,H))
# ----------------------------------------------------------------------------
class PallasDecoder:
    def __init__(self, input_size, hidden_size, vocab_size, n_layers=1, seed=0):
        self.n_layers = n_layers
        self.hidden_size = hidden_size
        self.vocab_size = vocab_size
        self.input_size = input_size

        key = jax.random.PRNGKey(seed)
        k = jax.random.split(key, 6)
        ortho = jax.nn.initializers.orthogonal()
        H, E, V = hidden_size, input_size, vocab_size
        bound = 1.0 / np.sqrt(H)

        # GRU params, PyTorch layout (3H, in), gate order [r, z, n]; orthogonal
        # weights (as in Decoder.__init__), nn.GRU / nn.Linear default biases.
        w_ih = ortho(k[0], (3 * H, E), jnp.float32)
        w_hh = ortho(k[1], (3 * H, H), jnp.float32)
        b_ih = jax.random.uniform(k[2], (3 * H,), jnp.float32, -bound, bound)
        b_hh = jax.random.uniform(k[3], (3 * H,), jnp.float32, -bound, bound)
        w_out = jax.random.uniform(k[4], (V, H), jnp.float32, -bound, bound)
        b_out = jax.random.uniform(k[5], (V,), jnp.float32, -bound, bound)

        # Pre-transposed bf16 weights for x @ W MXU matmuls; f32 biases.
        self.w_ih_t = jnp.transpose(w_ih).astype(jnp.bfloat16)     # (E, 3H)
        self.w_hh_t = jnp.transpose(w_hh).astype(jnp.bfloat16)     # (H, 3H)
        self.w_out_t = jnp.transpose(w_out).astype(jnp.bfloat16)   # (H, V)
        # Fold the r/z thirds of b_hh into the input-side bias (hoists them off
        # the serial recurrence); only the n-gate b_hh stays inside r * (...).
        b_fold = jnp.concatenate([b_hh[:2 * H], jnp.zeros((H,), jnp.float32)])
        self.b_in = (b_ih + b_fold).reshape(1, 3 * H)
        self.b_hh_n = b_hh[2 * H:].reshape(1, H)
        self.b_out = b_out.reshape(1, V)

        self._vmem_limit = _vmem_limit_bytes()

    def __call__(self, x, prev_state, *, max_ts=64, max_tb=256):
        B, S, _ = x.shape
        H, V = self.hidden_size, self.vocab_size
        G = 3 * H

        tb, ts, b_pad = _gru_tiles(B, S, H, G, self._vmem_limit, max_ts, max_tb)
        h = prev_state[0].astype(jnp.float32)                      # (B, H)
        if b_pad != B:
            x = jnp.pad(x, ((0, b_pad - B), (0, 0), (0, 0)))
            h = jnp.pad(h, ((0, b_pad - B), (0, 0)))

        out = x
        for _ in range(self.n_layers):
            # F.relu + input projection for all timesteps (parallel MXU matmul)
            gx = _in_proj(out.reshape(b_pad * S, -1), self.w_ih_t, self.b_in,
                          self._vmem_limit)
            gx = gx.reshape(b_pad, S, G)
            # serial GRU recurrence (time-chunked, batch-tiled)
            out, h = _gru_forward(gx, h, self.w_hh_t, self.b_hh_n, tb, ts,
                                  self._vmem_limit)                # (b_pad,S,H)

        logp = _out_logsoftmax(out.reshape(b_pad * S, H), self.w_out_t,
                               self.b_out, self._vmem_limit)
        logp = logp.reshape(b_pad, S, V)[:B]
        hidden = h[:B][None, :, :]
        return logp, hidden


# ----------------------------------------------------------------------------
# Pure-JAX reference (same math, same bf16 casts) for a correctness check.
# ----------------------------------------------------------------------------
def reference_forward(dec, x, prev_state):
    H, V = dec.hidden_size, dec.vocab_size
    B, S, _ = x.shape
    h = prev_state[0].astype(jnp.float32)
    out = x
    for _ in range(dec.n_layers):
        xr = jnp.maximum(out, 0.0).astype(jnp.bfloat16)
        gx = (jnp.einsum("bse,eg->bsg", xr, dec.w_ih_t,
                         preferred_element_type=jnp.float32) + dec.b_in)
        gx = gx.astype(jnp.bfloat16).astype(jnp.float32)   # gx stored as bf16

        def step(hc, gx_t):
            gh = jnp.dot(hc.astype(jnp.bfloat16), dec.w_hh_t,
                         preferred_element_type=jnp.float32)
            r = jax.nn.sigmoid(gx_t[:, :H] + gh[:, :H])
            z = jax.nn.sigmoid(gx_t[:, H:2 * H] + gh[:, H:2 * H])
            n = jnp.tanh(gx_t[:, 2 * H:] + r * (gh[:, 2 * H:] + dec.b_hh_n))
            h_new = (1.0 - z) * n + z * hc
            return h_new, h_new.astype(jnp.bfloat16)

        h, ys = lax.scan(step, h, jnp.swapaxes(gx, 0, 1))
        out = jnp.swapaxes(ys, 0, 1)                        # (B, S, H) bf16

    logits = (jnp.dot(out.reshape(-1, H), dec.w_out_t,
                      preferred_element_type=jnp.float32) + dec.b_out)
    logp = jax.nn.log_softmax(logits, axis=-1)
    return logp.reshape(B, S, V), h[None]


if __name__ == "__main__":
    B, S, E, H, V = 2, 16, 32, 32, 64   # input_size == hidden_size (n_layers loop)
    key = jax.random.PRNGKey(0)
    kx, kh = jax.random.split(key)
    x = jax.random.normal(kx, (B, S, E), jnp.float32)
    h0 = jax.random.normal(kh, (1, B, H), jnp.float32)

    dec = PallasDecoder(E, H, V, n_layers=1, seed=0)
    # max_ts=8 -> two time chunks, exercising the carried-state / pl.when path.
    logp, hidden = dec(x, h0, max_ts=8)
    jax.block_until_ready((logp, hidden))

    ref_logp, ref_hidden = reference_forward(dec, x, h0)
    assert logp.shape == (B, S, V) and hidden.shape == (1, B, H)
    np.testing.assert_allclose(np.asarray(logp), np.asarray(ref_logp),
                               rtol=2e-2, atol=2e-2)
    np.testing.assert_allclose(np.asarray(hidden), np.asarray(ref_hidden),
                               rtol=2e-2, atol=2e-2)
    print("KERNEL_OK")
</pallas_src>

<mosaic_0001>
module attributes {stable_mosaic.version = 11 : i64} {
  func.func @_in_proj_kernel(%arg0: i32, %arg1: memref<64x32xf32, #tpu.memory_space<vmem>>, %arg2: memref<32x96xbf16, #tpu.memory_space<vmem>>, %arg3: memref<1x96xf32, #tpu.memory_space<vmem>>, %arg4: memref<64x96xbf16, #tpu.memory_space<vmem>>) attributes {dimension_semantics = [#tpu.dimension_semantics<parallel>], iteration_bounds = array<i64: 2>, scalar_prefetch = 0 : i64, scratch_operands = 0 : i64, tpu.core_type = #tpu.core_type<tc>, window_params = [{transform_indices = @transform_0, window_bounds = array<i64: 64, 32>}, {pipeline_mode = #tpu.pipeline_mode<synchronous>, transform_indices = @transform_1, window_bounds = array<i64: 32, 96>}, {pipeline_mode = #tpu.pipeline_mode<synchronous>, transform_indices = @transform_2, window_bounds = array<i64: 1, 96>}, {transform_indices = @transform_3, window_bounds = array<i64: 64, 96>}]} {
    %c0 = arith.constant 0 : index
    %c0_0 = arith.constant 0 : index
    %0 = vector.load %arg1[%c0, %c0_0] : memref<64x32xf32, #tpu.memory_space<vmem>>, vector<64x32xf32>
    %cst = arith.constant 0.000000e+00 : f32
    %1 = vector.broadcast %cst : f32 to vector<64x32xf32>
    %2 = arith.maximumf %0, %1 : vector<64x32xf32>
    %3 = arith.truncf %2 : vector<64x32xf32> to vector<64x32xbf16>
    %c0_1 = arith.constant 0 : index
    %c0_2 = arith.constant 0 : index
    %4 = vector.load %arg2[%c0_1, %c0_2] : memref<32x96xbf16, #tpu.memory_space<vmem>>, vector<32x96xbf16>
    %cst_3 = arith.constant dense<0.000000e+00> : vector<64x96xf32>
    %5 = tpu.matmul %3, %4, %cst_3 {dimension_numbers = #tpu.dot_dimension_numbers<[1], [0], [0], [1], [0, 0, 1, 1], [], []>} : vector<64x32xbf16>, vector<32x96xbf16>, vector<64x96xf32> -> vector<64x96xf32>
    %c0_4 = arith.constant 0 : index
    %c0_5 = arith.constant 0 : index
    %6 = vector.load %arg3[%c0_4, %c0_5] : memref<1x96xf32, #tpu.memory_space<vmem>>, vector<1x96xf32>
    %7 = vector.broadcast %6 : vector<1x96xf32> to vector<64x96xf32>
    %8 = arith.addf %5, %7 : vector<64x96xf32>
    %9 = arith.truncf %8 : vector<64x96xf32> to vector<64x96xbf16>
    %c0_6 = arith.constant 0 : index
    %c0_7 = arith.constant 0 : index
    %10 = vector.load %arg4[%c0_6, %c0_7] : memref<64x96xbf16, #tpu.memory_space<vmem>>, vector<64x96xbf16>
    tpu.vector_store %arg4[%c0_6, %c0_7], %9 {strides = array<i32>} : memref<64x96xbf16, #tpu.memory_space<vmem>>, vector<64x96xbf16>,
    return
  }
  func.func @transform_0(%arg0: i32) -> (i32, i32) {
    %c0_i32 = arith.constant 0 : i32
    %c0_i32_0 = arith.constant 0 : i32
    return %arg0, %c0_i32 : i32, i32
  }
  func.func @transform_1(%arg0: i32) -> (i32, i32) {
    %c0_i32 = arith.constant 0 : i32
    %c0_i32_0 = arith.constant 0 : i32
    %c0_i32_1 = arith.constant 0 : i32
    return %c0_i32, %c0_i32_0 : i32, i32
  }
  func.func @transform_2(%arg0: i32) -> (i32, i32) {
    %c0_i32 = arith.constant 0 : i32
    %c0_i32_0 = arith.constant 0 : i32
    %c0_i32_1 = arith.constant 0 : i32
    return %c0_i32, %c0_i32_0 : i32, i32
  }
  func.func @transform_3(%arg0: i32) -> (i32, i32) {
    %c0_i32 = arith.constant 0 : i32
    %c0_i32_0 = arith.constant 0 : i32
    return %arg0, %c0_i32 : i32, i32
  }
}

</mosaic_0001>

<llo_original>
// kernel: tpu_custom_call.1
$region0: #{tpu_custom_call.1}
  #allocation0 [shape = 'u32[]', space=smem, size = 0x4, offset = 0x4, fixed_abs, tag = 'smem constant byte address 0x4 - core index']
  #allocation1 [shape = 'u32[144,128]{1,0:T(1,128)}', space=vmem, size = 0x12000, scoped, tag = 'internal scratch']
  %s0 = inlined_call_operand.hbm [shape: f32[128,32], index: 0, kind: input, shape index: {}]
  %s1 = inlined_call_operand.hbm [shape: bf16[32,96], index: 1, kind: input, shape index: {}]
  %s2 = inlined_call_operand.hbm [shape: f32[1,96], index: 2, kind: input, shape index: {}]
  %s3 = inlined_call_operand.hbm [shape: bf16[128,96], index: 3, kind: output, shape index: {}]
  %s4 = sld [smem:[#allocation0]]
  $region57: #{tpu_custom_call.1} parent=0
    _
  %s6 = ssub.s32 1, %s4
  %s7 = scalar_select 0, %s6, %s4
  $region1: #{tpu_custom_call.1} parent=0
    #allocation2 [shape = 'u8[65536]{0}', space=vmem, size = 0x10000, scoped, tag = 'input window, operand 0']
    #allocation3 [shape = 's32[2]{0}', space=sflag, size = 0x8, scoped, tag = 'scoped memory for tpu_custom_call.1']
    #allocation4 [shape = 's32[2]{0}', space=sflag, size = 0x8, scoped, tag = 'scoped memory for tpu_custom_call.1']
    #allocation5 [shape = 'u8[8192]{0}', space=vmem, size = 0x2000, scoped, tag = 'input window, operand 1, single buffered']
    #allocation6 [shape = 's32[1]{0}', space=sflag, size = 0x4, scoped, tag = 'scoped memory for tpu_custom_call.1']
    #allocation7 [shape = 'u8[512]{0}', space=vmem, size = 0x400, scoped, tag = 'input window, operand 2, single buffered']
    #allocation8 [shape = 'u8[32768]{0}', space=vmem, size = 0x8000, scoped, tag = 'output window, operand 0']
    %8 = vsyncpa [#allocation3], 0
    %s9 = scalar_lea.sflag [#allocation3], 1
    %10 = vsyncpa %s9, 0
    %11 = vsyncpa [#allocation6], 0
    %12 = vsyncpa [#allocation4], 0
    %s13 = scalar_lea.sflag [#allocation4], 1
    %14 = vsyncpa %s13, 0
    loop: start=0, step=1, limit=4
    $region2: #{tpu_custom_call.1} parent=1 // loop_pre_header
      _
    $region3: #{tpu_custom_call.1} parent=1 // loop_header
      %s16 = sphi 0, %s20
      %p17 = scmp.ge.s32.totalorder %s16, 4
      %s26 = sphi 0, %s28
      %s29 = sphi 0, %s26
      %s30 = sphi 0, %s29
      %s46 = sphi 0, %s30
      %s50 = sphi 0, %s50
      %s52 = sphi 0, %s50
      %s53 = sphi 0, %s52
      %s67 = sphi 0, %s53
      %s71 = sphi 0, %s71
      %s73 = sphi 0, %s71
      %s74 = sphi 0, %s73
      %s88 = sphi 0, %s74
      %s94 = sphi 0, %s96
      %s97 = sphi 0, %s94
      %s98 = sphi 0, %s97
      %s114 = sphi 0, %s98
    $region4: #{tpu_custom_call.1} parent=1 // loop_header_branch
      %19 = sbr.rel (%p17) target = $region8
    $region5: #{tpu_custom_call.1} parent=1 // loop_body
      %s21 = ssub.s32 %s16, 1
      %s22 = ssub.s32 %s16, 2
      %s23 = sadd.s32 %s16, 1
      %s24 = ssub.s32 %s16, %s23
      %p25 = scmp.eq.s32.totalorder %s24, 0
      %s27 = sadd.s32 %s26, 1
      %s28 = scalar_select %p25, %s26, %s27
      %p31 = pneg %p25
      %p32 = scmp.eq.s32.totalorder %s16, 1
      %p33 = por %p31, %p32
      %p34 = scmp.ne.s32.totalorder %s26, %s29
      %p35 = scmp.eq.s32.totalorder %s16, 0
      %p36 = por %p34, %p35
      %p37 = scmp.ne.s32.totalorder %s26, %s29
      %p38 = scmp.eq.s32.totalorder %s21, 1
      %p39 = por %p37, %p38
      %p40 = scmp.ne.s32.totalorder %s29, %s30
      %p41 = scmp.eq.s32.totalorder %s21, 0
      %p42 = por %p40, %p41
      %p43 = scmp.ne.s32.totalorder %s29, %s30
      %p44 = scmp.eq.s32.totalorder %s22, 1
      %p45 = por %p43, %p44
      %p47 = scmp.ne.s32.totalorder %s30, %s46
      %p48 = scmp.eq.s32.totalorder %s22, 0
      %p49 = por %p47, %p48
      %s51 = sadd.s32 %s50, 1
      %p54 = scmp.eq.s32.totalorder %s16, 1
      %p55 = scmp.ne.s32.totalorder %s50, %s52
      %p56 = scmp.eq.s32.totalorder %s16, 0
      %p57 = por %p55, %p56
      %p58 = scmp.ne.s32.totalorder %s50, %s52
      %p59 = scmp.eq.s32.totalorder %s21, 1
      %p60 = por %p58, %p59
      %p61 = scmp.ne.s32.totalorder %s52, %s53
      %p62 = scmp.eq.s32.totalorder %s21, 0
      %p63 = por %p61, %p62
      %p64 = scmp.ne.s32.totalorder %s52, %s53
      %p65 = scmp.eq.s32.totalorder %s22, 1
      %p66 = por %p64, %p65
      %p68 = scmp.ne.s32.totalorder %s53, %s67
      %p69 = scmp.eq.s32.totalorder %s22, 0
      %p70 = por %p68, %p69
      %s72 = sadd.s32 %s71, 1
      %p75 = scmp.eq.s32.totalorder %s16, 1
      %p76 = scmp.ne.s32.totalorder %s71, %s73
      %p77 = scmp.eq.s32.totalorder %s16, 0
      %p78 = por %p76, %p77
      %p79 = scmp.ne.s32.totalorder %s71, %s73
      %p80 = scmp.eq.s32.totalorder %s21, 1
      %p81 = por %p79, %p80
      %p82 = scmp.ne.s32.totalorder %s73, %s74
      %p83 = scmp.eq.s32.totalorder %s21, 0
      %p84 = por %p82, %p83
      %p85 = scmp.ne.s32.totalorder %s73, %s74
      %p86 = scmp.eq.s32.totalorder %s22, 1
      %p87 = por %p85, %p86
      %p89 = scmp.ne.s32.totalorder %s74, %s88
      %p90 = scmp.eq.s32.totalorder %s22, 0
      %p91 = por %p89, %p90
      %s92 = ssub.s32 %s16, %s23
      %p93 = scmp.eq.s32.totalorder %s92, 0
      %s95 = sadd.s32 %s94, 1
      %s96 = scalar_select %p93, %s94, %s95
      %p99 = pneg %p93
      %p100 = scmp.eq.s32.totalorder %s16, 1
      %p101 = por %p99, %p100
      %p102 = scmp.ne.s32.totalorder %s94, %s97
      %p103 = scmp.eq.s32.totalorder %s16, 0
      %p104 = por %p102, %p103
      %p105 = scmp.ne.s32.totalorder %s94, %s97
      %p106 = scmp.eq.s32.totalorder %s21, 1
      %p107 = por %p105, %p106
      %p108 = scmp.ne.s32.totalorder %s97, %s98
      %p109 = scmp.eq.s32.totalorder %s21, 0
      %p110 = por %p108, %p109
      %p111 = scmp.ne.s32.totalorder %s97, %s98
      %p112 = scmp.eq.s32.totalorder %s22, 1
      %p113 = por %p111, %p112
      %p115 = scmp.ne.s32.totalorder %s98, %s114
      %p116 = scmp.eq.s32.totalorder %s22, 0
      %p117 = por %p115, %p116
      %p118 = scmp.le.s32.totalorder 1, %s16
      %p119 = scmp.lt.s32.totalorder %s16, 3
      %p120 = pnand %p118, %p119
      %p121 = pneg %p120
      // Predicated region
      $region9: #{tpu_custom_call.1} parent=5 // pred_check
        _
      $region10: #{tpu_custom_call.1} parent=5 // pred_check_branch
        %123 = sbr.rel (%p120) target = $region12
      $region11: #{tpu_custom_call.1} parent=5 // pred_region
        %s124 = ssub.s32 %s16, 1
        // Predicated region
        $region13: #{tpu_custom_call.1} parent=11 // pred_check
          %p125 = pneg %p63
        $region14: #{tpu_custom_call.1} parent=11 // pred_check_branch
          %127 = sbr.rel (%p125) target = $region16
        $region15: #{tpu_custom_call.1} parent=11 // pred_region
          %s129 = ssub.s32 256, 256
          %130 = vsyncadd [#allocation6], %s129
          %s131 = sshll.u32 [#allocation5], 4
          %s132 = int_to_ptr.vmem [resolvable:$true] %s131
          %137 = dma.hbm_to_vmem [thread:$0]  %s1, 256, %s132, [#allocation6], 64, 64, 4
        $region16: #{tpu_custom_call.1} parent=11 // pred_fallthru
          _
        // Predicated region
        $region17: #{tpu_custom_call.1} parent=11 // pred_check
          %p138 = pneg %p84
        $region18: #{tpu_custom_call.1} parent=11 // pred_check_branch
          %140 = sbr.rel (%p138) target = $region20
        $region19: #{tpu_custom_call.1} parent=11 // pred_region
          %s142 = ssub.s32 16, 16
          %143 = vsyncadd [#allocation6], %s142
          %s145 = sshll.u32 [#allocation7], 4
          %s146 = int_to_ptr.vmem [resolvable:$true] %s145
          %148 = dma.hbm_to_vmem [thread:$0]  %s2, 16, %s146, [#allocation6]
        $region20: #{tpu_custom_call.1} parent=11 // pred_fallthru
          _
      $region12: #{tpu_custom_call.1} parent=5 // pred_fallthru
        _
      %p149 = scmp.lt.s32.totalorder %s16, 2
      // Predicated region
      $region21: #{tpu_custom_call.1} parent=5 // pred_check
        %p150 = pneg %p149
      $region22: #{tpu_custom_call.1} parent=5 // pred_check_branch
        %152 = sbr.rel (%p150) target = $region24
      $region23: #{tpu_custom_call.1} parent=5 // pred_region
        // Predicated region
        $region25: #{tpu_custom_call.1} parent=23 // pred_check
          %p153 = pneg %p36
        $region26: #{tpu_custom_call.1} parent=23 // pred_check_branch
          %155 = sbr.rel (%p153) target = $region28
        $region27: #{tpu_custom_call.1} parent=23 // pred_region
          %s156 = sand.u32 %s26, 1
          %s157 = scalar_lea.sflag [#allocation3], %s156
          %s158 = sand.u32 %s26, 1
          %s159 = smul.addr %s158, 64
          %s160 = scalar_lea.vmem [#allocation2], %s159
          %s161 = smul.u32 8, %s16
          %s163 = ssub.s32 1024, 1024
          %164 = vsyncadd %s157, %s163
          %s165 = smul.addr %s161, 128
          %s166 = scalar_lea.hbm %s0, %s165
          %s167 = sshll.u32 %s160, 4
          %s168 = int_to_ptr.vmem [resolvable:$true] %s167
          %173 = dma.hbm_to_vmem [thread:$0]  %s166, 1024, %s168, %s157, 128, 128, 8
        $region28: #{tpu_custom_call.1} parent=23 // pred_fallthru
          _
      $region24: #{tpu_custom_call.1} parent=5 // pred_fallthru
        _
      %p174 = scmp.le.s32.totalorder 1, %s16
      %p175 = scmp.lt.s32.totalorder %s16, 3
      %p176 = pnand %p174, %p175
      %p177 = pneg %p176
      // Predicated region
      $region29: #{tpu_custom_call.1} parent=5 // pred_check
        _
      $region30: #{tpu_custom_call.1} parent=5 // pred_check_branch
        %179 = sbr.rel (%p176) target = $region32
      $region31: #{tpu_custom_call.1} parent=5 // pred_region
        %s180 = ssub.s32 %s16, 1
        %s181 = sand.u32 %s29, 1
        %s182 = scalar_lea.sflag [#allocation3], %s181
        %s183 = sand.u32 %s29, 1
        %s184 = smul.addr %s183, 64
        %s185 = scalar_lea.vmem [#allocation2], %s184
        // Predicated region
        $region33: #{tpu_custom_call.1} parent=31 // pred_check
          %p186 = pneg %p42
        $region34: #{tpu_custom_call.1} parent=31 // pred_check_branch
          %188 = sbr.rel (%p186) target = $region36
        $region35: #{tpu_custom_call.1} parent=31 // pred_region
          %189 = dma.done %s182, 1024
        $region36: #{tpu_custom_call.1} parent=31 // pred_fallthru
          _
        // Predicated region
        $region37: #{tpu_custom_call.1} parent=31 // pred_check
          %p190 = pneg %p63
        $region38: #{tpu_custom_call.1} parent=31 // pred_check_branch
          %192 = sbr.rel (%p190) target = $region40
        $region39: #{tpu_custom_call.1} parent=31 // pred_region
          %193 = dma.done [#allocation6], 256
        $region40: #{tpu_custom_call.1} parent=31 // pred_fallthru
          _
        // Predicated region
        $region41: #{tpu_custom_call.1} parent=31 // pred_check
          %p194 = pneg %p84
        $region42: #{tpu_custom_call.1} parent=31 // pred_check_branch
          %196 = sbr.rel (%p194) target = $region44
        $region43: #{tpu_custom_call.1} parent=31 // pred_region
          %197 = dma.done [#allocation6], 16
        $region44: #{tpu_custom_call.1} parent=31 // pred_fallthru
          _
        %s198 = sand.u32 %s29, 1
        %s199 = scalar_lea.sflag [#allocation3], %s198
        %s200 = sand.u32 %s29, 1
        %s201 = smul.addr %s200, 64
        %s202 = scalar_lea.vmem [#allocation2], %s201
        %p203 = pneg %p42
        %p204 = pneg %p39
        %p205 = pneg %p63
        %p206 = pneg %p60
        %p207 = pneg %p84
        %p208 = pneg %p81
        %p209 = pneg %p110
        %p210 = pneg %p107
        %s211 = sand.u32 %s97, 1
        %s212 = scalar_lea.sflag [#allocation4], %s211
        %s213 = sand.u32 %s97, 1
        %s214 = smul.addr %s213, 32
        %s215 = scalar_lea.vmem [#allocation8], %s214
        %s216 = smul.u32 8, %s21
        %s217 = smul.u32 8, %s21
        %v219 = vld [vmem:[%s185] sm:$0xff]
        %v220 = vld [vmem:[%s185 + $0x8] sm:$0xff]
        %v221 = vld [vmem:[%s185 + $0x10] sm:$0xff]
        %v222 = vld [vmem:[%s185 + $0x18] sm:$0xff]
        %v223 = vld [vmem:[%s185 + $0x20] sm:$0xff]
        %v224 = vld [vmem:[%s185 + $0x28] sm:$0xff]
        %v225 = vld [vmem:[%s185 + $0x30] sm:$0xff]
        %v226 = vld [vmem:[%s185 + $0x38] sm:$0xff]
        %v227 = vmax.f32 %v219, 0.0
        %v228 = vmax.f32 %v220, 0.0
        %v229 = vmax.f32 %v221, 0.0
        %v230 = vmax.f32 %v222, 0.0
        %v231 = vmax.f32 %v223, 0.0
        %v232 = vmax.f32 %v224, 0.0
        %v233 = vmax.f32 %v225, 0.0
        %v234 = vmax.f32 %v226, 0.0
        %v235 = vpack.c.bf16 %v228, %v227
        %v236 = vpack.c.bf16 %v230, %v229
        %v237 = vpack.c.bf16 %v232, %v231
        %v238 = vpack.c.bf16 %v234, %v233
        %v239 = vld [vmem:[#allocation5] sm:$0xf]
        %v240 = vld [vmem:[#allocation5 + $0x4] sm:$0xf]
        %v241 = vld [vmem:[#allocation5 + $0x8] sm:$0xf]
        %v242 = vld [vmem:[#allocation5 + $0xc] sm:$0xf]
        %v243 = vld [vmem:[#allocation7] sm:$0x1]
        %v245 = vlaneseq
        %v246 = vshrl.u32 %v245, 7
        %v247 = vsub.s32 0, %v246
        %v248 = vrot.slane %v243, %v247
        %v254 = vunpack.c.l.b16 %v239
        %v255 = vunpack.c.l.b16 %v240
        %v256 = vunpack.c.l.b16 %v241
        %v257 = vunpack.c.l.b16 %v242
        %v258 = vpack.c.b16 %v255, %v254
        %v259 = vpack.c.b16 %v257, %v256
        %vm262 = vcmask 261120
        %v264 = vsel %vm262, %v235, 0
        %v267 = vsel %vm262, %v236, 0
        %v270 = vsel %vm262, %v237, 0
        %v273 = vsel %vm262, %v238, 0
        %275 = vmatprep.subr.bf16.mxu0 0
        %276 = vmatpush1.bf16.msra.mxu0 %v258
        %277 = vmatprep.subr.bf16.mxu0 0
        %278 = vmatpush1.bf16.msra.mxu0 %v259
        %279 = vmatprep.subr.bf16.mxu0 0
        %280 = vmatpush1.bf16.msra.mxu0 0
        %281 = vmatprep.subr.bf16.mxu0 0
        %282 = vmatpush1.bf16.msra.mxu0 0
        %283 = vmatprep.subr.bf16.mxu0 0
        %284 = vmatpush1.bf16.msra.mxu0 0
        %285 = vmatprep.subr.bf16.mxu0 0
        %286 = vmatpush1.bf16.msra.mxu0 0
        %287 = vmatprep.subr.bf16.mxu0 0
        %288 = vmatpush1.bf16.msra.mxu0 0
        %289 = vmatprep.subr.bf16.mxu0 0
        %290 = vmatpush1.bf16.msra.mxu0 0
        %291 = vmatprep.subr.bf16.mxu0 0
        %292 = vmatpush1.bf16.msra.mxu0 0
        %293 = vmatprep.subr.bf16.mxu0 0
        %294 = vmatpush1.bf16.msra.mxu0 0
        %295 = vmatprep.subr.bf16.mxu0 0
        %296 = vmatpush1.bf16.msra.mxu0 0
        %297 = vmatprep.subr.bf16.mxu0 0
        %298 = vmatpush1.bf16.msra.mxu0 0
        %299 = vmatprep.subr.bf16.mxu0 0
        %300 = vmatpush1.bf16.msra.mxu0 0
        %301 = vmatprep.subr.bf16.mxu0 0
        %302 = vmatpush1.bf16.msra.mxu0 0
        %303 = vmatprep.subr.bf16.mxu0 0
        %304 = vmatpush1.bf16.msra.mxu0 0
        %305 = vmatprep.subr.bf16.mxu0 0
        %306 = vmatpush1.bf16.msra.mxu0 0
        %307 = vmatprep.mubr.bf16.mxu0 0
        %308 = vmatmul.mubr.bf16.gmra.mrb[0].mxu0 %v264
        %v309 = vpop.f32.mrb[0].mxu0
        %v310 = vadd.f32 %v248, %v309
        %v311 = vpop.f32.mrb[0].mxu0
        %v312 = vpop.f32.mrb[0].mxu0
        %v313 = vadd.f32 %v248, %v312
        %v314 = vpop.f32.mrb[0].mxu0
        %315 = vmatprep.mubr.bf16.mxu0 0
        %316 = vmatmul.mubr.bf16.gmra.mrb[0].mxu0 %v267
        %v317 = vpop.f32.mrb[0].mxu0
        %v318 = vadd.f32 %v248, %v317
        %v319 = vpop.f32.mrb[0].mxu0
        %v320 = vpop.f32.mrb[0].mxu0
        %v321 = vadd.f32 %v248, %v320
        %v322 = vpop.f32.mrb[0].mxu0
        %323 = vmatprep.mubr.bf16.mxu0 0
        %324 = vmatmul.mubr.bf16.gmra.mrb[0].mxu0 %v270
        %v325 = vpop.f32.mrb[0].mxu0
        %v326 = vadd.f32 %v248, %v325
        %v327 = vpop.f32.mrb[0].mxu0
        %v328 = vpop.f32.mrb[0].mxu0
        %v329 = vadd.f32 %v248, %v328
        %v330 = vpop.f32.mrb[0].mxu0
        %331 = vmatprep.mubr.bf16.mxu0 0
        %332 = vmatmul.mubr.bf16.gmra.mrb[0].mxu0 %v273
        %v333 = vpop.f32.mrb[0].mxu0
        %v334 = vadd.f32 %v248, %v333
        %v335 = vpop.f32.mrb[0].mxu0
        %v336 = vpop.f32.mrb[0].mxu0
        %v337 = vadd.f32 %v248, %v336
        %v338 = vpop.f32.mrb[0].mxu0
        %339 = vdwg.mxu0
        %v340 = vpack.c.bf16 %v313, %v310
        %v341 = vpack.c.bf16 %v321, %v318
        %v342 = vpack.c.bf16 %v329, %v326
        %v343 = vpack.c.bf16 %v337, %v334
        %v348 = vunpack.c.l.b16 %v340
        %v349 = vunpack.c.h.b16 %v340
        %v350 = vunpack.c.l.b16 %v341
        %v351 = vunpack.c.h.b16 %v341
        %v352 = vunpack.c.l.b16 %v342
        %v353 = vunpack.c.h.b16 %v342
        %v354 = vunpack.c.l.b16 %v343
        %v355 = vunpack.c.h.b16 %v343
        %v356 = vpack.c.b16 %v348, %v348
        %v357 = vpack.c.b16 %v349, %v349
        %v358 = vpack.c.b16 %v350, %v350
        %v359 = vpack.c.b16 %v351, %v351
        %v360 = vpack.c.b16 %v352, %v352
        %v361 = vpack.c.b16 %v353, %v353
        %v362 = vpack.c.b16 %v354, %v354
        %v363 = vpack.c.b16 %v355, %v355
        %vm372 = vcmask 781312
        %373 = vst.msk [vmem:[%s215] sm:$0xf] %vm372, %v356
        %374 = vst.msk [vmem:[%s215 + $0x4] sm:$0xf] %vm372, %v357
        %375 = vst.msk [vmem:[%s215 + $0x8] sm:$0xf] %vm372, %v358
        %376 = vst.msk [vmem:[%s215 + $0xc] sm:$0xf] %vm372, %v359
        %377 = vst.msk [vmem:[%s215 + $0x10] sm:$0xf] %vm372, %v360
        %378 = vst.msk [vmem:[%s215 + $0x14] sm:$0xf] %vm372, %v361
        %379 = vst.msk [vmem:[%s215 + $0x18] sm:$0xf] %vm372, %v362
        %380 = vst.msk [vmem:[%s215 + $0x1c] sm:$0xf] %vm372, %v363
        %s381 = sand.u32 %s97, 1
        %s382 = scalar_lea.sflag [#allocation4], %s381
        %s383 = sand.u32 %s97, 1
        %s384 = smul.addr %s383, 32
        %s385 = scalar_lea.vmem [#allocation8], %s384
        // Predicated region
        $region45: #{tpu_custom_call.1} parent=31 // pred_check
          %p386 = pneg %p107
        $region46: #{tpu_custom_call.1} parent=31 // pred_check_branch
          %388 = sbr.rel (%p386) target = $region48
        $region47: #{tpu_custom_call.1} parent=31 // pred_region
          %s389 = smul.u32 8, %s21
          %s391 = ssub.s32 512, 512
          %392 = vsyncadd %s382, %s391
          %s393 = smul.addr %s389, 64
          %s394 = scalar_lea.hbm %s3, %s393
          %s395 = sshll.u32 %s385, 4
          %s396 = int_to_ptr.vmem [resolvable:$true] %s395
          %401 = dma.vmem_to_hbm [thread:$0]  %s396, 512, %s394, %s382, 64, 64, 4
        $region48: #{tpu_custom_call.1} parent=31 // pred_fallthru
          _
      $region32: #{tpu_custom_call.1} parent=5 // pred_fallthru
        _
      %p402 = scmp.le.s32.totalorder 2, %s16
      // Predicated region
      $region49: #{tpu_custom_call.1} parent=5 // pred_check
        %p403 = pneg %p402
      $region50: #{tpu_custom_call.1} parent=5 // pred_check_branch
        %405 = sbr.rel (%p403) target = $region52
      $region51: #{tpu_custom_call.1} parent=5 // pred_region
        %s406 = ssub.s32 %s16, 2
        // Predicated region
        $region53: #{tpu_custom_call.1} parent=51 // pred_check
          %p407 = pneg %p113
        $region54: #{tpu_custom_call.1} parent=51 // pred_check_branch
          %409 = sbr.rel (%p407) target = $region56
        $region55: #{tpu_custom_call.1} parent=51 // pred_region
          %s410 = sand.u32 %s98, 1
          %s411 = scalar_lea.sflag [#allocation4], %s410
          %s412 = sand.u32 %s98, 1
          %s413 = smul.addr %s412, 32
          %s414 = scalar_lea.vmem [#allocation8], %s413
          %415 = dma.done %s411, 512
        $region56: #{tpu_custom_call.1} parent=51 // pred_fallthru
          _
      $region52: #{tpu_custom_call.1} parent=5 // pred_fallthru
        _
    $region6: #{tpu_custom_call.1} parent=1 // loop_footer
      %s20 = sadd.s32 1, %s16
    $region7: #{tpu_custom_call.1} parent=1 // loop_footer_branch
      %15 = sbr.rel target = $region3
    $region8: #{tpu_custom_call.1} parent=1 // loop_exit
      _
    %416 = vsyncpa [#allocation3], 1
    %s417 = scalar_lea.sflag [#allocation3], 1
    %418 = vsyncpa %s417, 1
    %419 = vsyncpa [#allocation6], 1
    %420 = vsyncpa [#allocation4], 1
    %s421 = scalar_lea.sflag [#allocation4], 1
    %422 = vsyncpa %s421, 1

</llo_original>
